<compile_context>
chip_gen: v6e
topology: v6e:2x2x1
jax: 0.10.0
libtpu: 0.0.40
codegen_flags: <defaults>
</compile_context>

<pallas_src>
import jax
import jax.numpy as jnp
from jax.experimental import pallas as pl
from jax.experimental.pallas import tpu as pltpu


def _round_up(x, m):
    return ((x + m - 1) // m) * m


def _linear_model_kernel(ids_ref, emb_ref, w1_ref, b1_ref, w2_ref, b2_ref,
                         w3_ref, b3_ref, out_ref):
    """One batch tile: fused embedding gather + 2-layer MLP + head + sigmoid."""
    cdt = w1_ref.dtype                           # matmul compute dtype (f32/bf16)
    ids = ids_ref[...]                           # (TM, C) int32
    tm, num_cat = ids.shape
    vocab, hidden = emb_ref.shape

    table = emb_ref[...]                         # (V, H), VMEM-resident
    lane_iota = jax.lax.broadcasted_iota(jnp.int32, (tm, vocab), 1)  # hoisted

    # Layer 1: x @ W1 + b1 where x = concat_c(Embedding(ids[:, c])).
    # Done per category as (one-hot @ table) @ W1[c*H:(c+1)*H, :] — an exact
    # on-chip row gather on the MXU, no HBM gather traffic, no concat needed.
    h1 = None
    for c in range(num_cat):
        onehot = (ids[:, c:c + 1] == lane_iota).astype(cdt)           # (TM, V)
        emb_c = jnp.dot(onehot, table,
                        preferred_element_type=jnp.float32)           # (TM, H) f32
        part = jnp.dot(emb_c.astype(cdt),
                       w1_ref[c * hidden:(c + 1) * hidden, :],
                       preferred_element_type=jnp.float32)            # (TM, H) f32
        h1 = part if h1 is None else h1 + part
    h1 = jnp.maximum(h1 + b1_ref[...], 0.0)                           # ReLU, f32

    # Layer 2.
    h2 = jnp.dot(h1.astype(cdt), w2_ref[...],
                 preferred_element_type=jnp.float32) + b2_ref[...]
    h2 = jnp.maximum(h2, 0.0)                                         # ReLU, f32

    # Prediction head (H -> 1) as VPU multiply + cross-lane sum; the
    # PredictionLayer bias is already folded into b3 on the host.
    logit = jnp.sum(h2 * w3_ref[...], axis=-1, keepdims=True) + b3_ref[...]
    out_ref[...] = jax.nn.sigmoid(logit).astype(out_ref.dtype)        # (TM, 1)


def linear_model_forward(input_ids, emb_table, w1, b1, w2, b2, w3, b3,
                         pred_bias, *, compute_dtype=jnp.float32,
                         block_rows=512):
    """JAX/Pallas equivalent of LinearModel.forward.

    token_type_ids / attention_mask are unused by the PyTorch forward, so they
    are not taken here. Weights are stored as [in, out] (x @ W + b)."""
    ids = input_ids[:, 2::2].astype(jnp.int32)            # [B, num_cat]
    batch, num_cat = ids.shape
    vocab, hidden = emb_table.shape

    # Batch tile: multiple of 8 sublanes; pad the (tiny) ids to a whole grid.
    tm = min(block_rows, _round_up(batch, 8))
    b_pad = _round_up(batch, tm)
    if b_pad != batch:
        ids = jnp.pad(ids, ((0, b_pad - batch), (0, 0)))

    # One-off host-side parameter prep: compute-dtype matmul weights, fold the
    # PredictionLayer bias into the head bias, head weight as a (1, H) row.
    emb_c = emb_table.astype(compute_dtype)
    w1_c = w1.astype(compute_dtype)
    w2_c = w2.astype(compute_dtype)
    b1_f = b1.reshape(1, hidden).astype(jnp.float32)
    b2_f = b2.reshape(1, hidden).astype(jnp.float32)
    w3_row = w3.reshape(1, hidden).astype(jnp.float32)
    b3_eff = (b3.reshape(1, 1) + pred_bias.reshape(1, 1)).astype(jnp.float32)

    weight_bytes = sum(int(a.size) * a.dtype.itemsize
                       for a in (emb_c, w1_c, b1_f, w2_c, b2_f, w3_row, b3_eff))
    cost = pl.CostEstimate(
        flops=2 * b_pad * (num_cat * vocab * hidden
                           + num_cat * hidden * hidden
                           + hidden * hidden + hidden),
        transcendentals=b_pad,
        bytes_accessed=int(ids.size) * 4 + weight_bytes + b_pad * 4,
    )

    resident = lambda shape: pl.BlockSpec(shape, lambda i: (0,) * len(shape))

    out = pl.pallas_call(
        _linear_model_kernel,
        out_shape=jax.ShapeDtypeStruct((b_pad, 1), jnp.float32),
        grid=(b_pad // tm,),
        in_specs=[
            pl.BlockSpec((tm, num_cat), lambda i: (i, 0)),    # ids (streamed)
            resident((vocab, hidden)),                        # embedding table
            resident((num_cat * hidden, hidden)),             # w1
            resident((1, hidden)),                            # b1
            resident((hidden, hidden)),                       # w2
            resident((1, hidden)),                            # b2
            resident((1, hidden)),                            # w3 as a row
            resident((1, 1)),                                 # b3 + pred_bias
        ],
        out_specs=pl.BlockSpec((tm, 1), lambda i: (i, 0)),
        compiler_params=pltpu.CompilerParams(
            dimension_semantics=("parallel",)),
        cost_estimate=cost,
    )(ids, emb_c, w1_c, b1_f, w2_c, b2_f, w3_row, b3_eff)
    return out[:batch]


if __name__ == "__main__":
    # Small deterministic configuration consistent with the module:
    #   encoder_hidden_dim H = 32, len(categorical_features) = 4,
    #   vocab (len(tokenizer)) = 256, batch B = 2, seq_len = 10
    #   (input_ids[:, 2::2] -> 4 tokens == num_categorical_features).
    B, SEQ, NUM_CAT, H, VOCAB = 2, 10, 4, 32, 256
    D_IN = NUM_CAT * H

    key = jax.random.PRNGKey(0)
    k_emb, k_ids, k_w1, k_b1, k_w2, k_b2, k_w3, k_b3 = jax.random.split(key, 8)

    emb_table = jax.random.normal(k_emb, (VOCAB, H), dtype=jnp.float32)      # nn.Embedding
    # linears: weights ~ N(0, 0.0001), stored as [in, out]
    w1 = 0.0001 * jax.random.normal(k_w1, (D_IN, H), dtype=jnp.float32)
    b1 = (jax.random.uniform(k_b1, (1, H), dtype=jnp.float32) * 2 - 1) / jnp.sqrt(D_IN)
    w2 = 0.0001 * jax.random.normal(k_w2, (H, H), dtype=jnp.float32)
    b2 = (jax.random.uniform(k_b2, (1, H), dtype=jnp.float32) * 2 - 1) / jnp.sqrt(H)
    # prediction_head (default nn.Linear init approximated with uniform fan-in bound)
    w3 = (jax.random.uniform(k_w3, (H, 1), dtype=jnp.float32) * 2 - 1) / jnp.sqrt(H)
    b3 = (jax.random.uniform(k_b3, (1, 1), dtype=jnp.float32) * 2 - 1) / jnp.sqrt(H)
    pred_bias = jnp.zeros((1, 1), dtype=jnp.float32)                         # PredictionLayer.bias

    input_ids = jax.random.randint(k_ids, (B, SEQ), 0, VOCAB, dtype=jnp.int32)

    out_f32 = linear_model_forward(input_ids, emb_table, w1, b1, w2, b2, w3,
                                   b3, pred_bias, compute_dtype=jnp.float32)
    out_bf16 = linear_model_forward(input_ids, emb_table, w1, b1, w2, b2, w3,
                                    b3, pred_bias, compute_dtype=jnp.bfloat16)
    out_f32, out_bf16 = jax.block_until_ready((out_f32, out_bf16))

    # Pure-JAX reference of the same math.
    x_ref = jnp.take(emb_table, input_ids[:, 2::2], axis=0).reshape(B, -1)
    h = jnp.maximum(x_ref @ w1 + b1, 0.0)
    h = jnp.maximum(h @ w2 + b2, 0.0)
    ref = jax.nn.sigmoid(h @ w3 + b3 + pred_bias)

    assert out_f32.shape == (B, 1) and out_bf16.shape == (B, 1)
    assert jnp.allclose(out_f32, ref, atol=1e-5), (out_f32, ref)
    assert jnp.allclose(out_bf16, ref, atol=5e-3), (out_bf16, ref)

    print("KERNEL_OK")
</pallas_src>

<mosaic_0001>
module attributes {stable_mosaic.version = 11 : i64} {
  func.func @_linear_model_kernel(%arg0: i32, %arg1: memref<8x4xi32, #tpu.memory_space<vmem>>, %arg2: memref<256x32xf32, #tpu.memory_space<vmem>>, %arg3: memref<128x32xf32, #tpu.memory_space<vmem>>, %arg4: memref<1x32xf32, #tpu.memory_space<vmem>>, %arg5: memref<32x32xf32, #tpu.memory_space<vmem>>, %arg6: memref<1x32xf32, #tpu.memory_space<vmem>>, %arg7: memref<1x32xf32, #tpu.memory_space<vmem>>, %arg8: memref<1x1xf32, #tpu.memory_space<vmem>>, %arg9: memref<8x1xf32, #tpu.memory_space<vmem>>) attributes {dimension_semantics = [#tpu.dimension_semantics<parallel>], iteration_bounds = array<i64: 1>, scalar_prefetch = 0 : i64, scratch_operands = 0 : i64, tpu.core_type = #tpu.core_type<tc>, window_params = [{transform_indices = @transform_0, window_bounds = array<i64: 8, 4>}, {pipeline_mode = #tpu.pipeline_mode<synchronous>, transform_indices = @transform_1, window_bounds = array<i64: 256, 32>}, {pipeline_mode = #tpu.pipeline_mode<synchronous>, transform_indices = @transform_2, window_bounds = array<i64: 128, 32>}, {pipeline_mode = #tpu.pipeline_mode<synchronous>, transform_indices = @transform_3, window_bounds = array<i64: 1, 32>}, {pipeline_mode = #tpu.pipeline_mode<synchronous>, transform_indices = @transform_4, window_bounds = array<i64: 32, 32>}, {pipeline_mode = #tpu.pipeline_mode<synchronous>, transform_indices = @transform_5, window_bounds = array<i64: 1, 32>}, {pipeline_mode = #tpu.pipeline_mode<synchronous>, transform_indices = @transform_6, window_bounds = array<i64: 1, 32>}, {pipeline_mode = #tpu.pipeline_mode<synchronous>, transform_indices = @transform_7, window_bounds = array<i64: 1, 1>}, {transform_indices = @transform_8, window_bounds = array<i64: 8, 1>}]} {
    %c0 = arith.constant 0 : index
    %c0_0 = arith.constant 0 : index
    %0 = vector.load %arg1[%c0, %c0_0] : memref<8x4xi32, #tpu.memory_space<vmem>>, vector<8x4xi32>
    %c0_1 = arith.constant 0 : index
    %c0_2 = arith.constant 0 : index
    %1 = vector.load %arg2[%c0_1, %c0_2] : memref<256x32xf32, #tpu.memory_space<vmem>>, vector<256x32xf32>
    %2 = tpu.iota {dimensions = array<i32: 1>} : vector<8x256xi32>
    %3 = vector.extract_strided_slice %0 {offsets = [0, 0], sizes = [8, 1], strides = [1, 1]} : vector<8x4xi32> to vector<8x1xi32>
    %4 = vector.broadcast %3 : vector<8x1xi32> to vector<8x256xi32>
    %5 = arith.cmpi eq, %4, %2 : vector<8x256xi32>
    %6 = arith.extui %5 : vector<8x256xi1> to vector<8x256xi32>
    %7 = arith.sitofp %6 : vector<8x256xi32> to vector<8x256xf32>
    %cst = arith.constant dense<0.000000e+00> : vector<8x32xf32>
    %8 = tpu.matmul %7, %1, %cst {dimension_numbers = #tpu.dot_dimension_numbers<[1], [0], [0], [1], [0, 0, 1, 1], [], []>} : vector<8x256xf32>, vector<256x32xf32>, vector<8x32xf32> -> vector<8x32xf32>
    %c0_3 = arith.constant 0 : index
    %c0_4 = arith.constant 0 : index
    %9 = vector.load %arg3[%c0_3, %c0_4] : memref<128x32xf32, #tpu.memory_space<vmem>>, vector<32x32xf32>
    %cst_5 = arith.constant dense<0.000000e+00> : vector<8x32xf32>
    %10 = tpu.matmul %8, %9, %cst_5 {dimension_numbers = #tpu.dot_dimension_numbers<[1], [0], [0], [1], [0, 0, 1, 1], [], []>} : vector<8x32xf32>, vector<32x32xf32>, vector<8x32xf32> -> vector<8x32xf32>
    %11 = vector.extract_strided_slice %0 {offsets = [0, 1], sizes = [8, 1], strides = [1, 1]} : vector<8x4xi32> to vector<8x1xi32>
    %12 = vector.broadcast %11 : vector<8x1xi32> to vector<8x256xi32>
    %13 = arith.cmpi eq, %12, %2 : vector<8x256xi32>
    %14 = arith.extui %13 : vector<8x256xi1> to vector<8x256xi32>
    %15 = arith.sitofp %14 : vector<8x256xi32> to vector<8x256xf32>
    %cst_6 = arith.constant dense<0.000000e+00> : vector<8x32xf32>
    %16 = tpu.matmul %15, %1, %cst_6 {dimension_numbers = #tpu.dot_dimension_numbers<[1], [0], [0], [1], [0, 0, 1, 1], [], []>} : vector<8x256xf32>, vector<256x32xf32>, vector<8x32xf32> -> vector<8x32xf32>
    %c32 = arith.constant 32 : index
    %c0_7 = arith.constant 0 : index
    %17 = vector.load %arg3[%c32, %c0_7] : memref<128x32xf32, #tpu.memory_space<vmem>>, vector<32x32xf32>
    %cst_8 = arith.constant dense<0.000000e+00> : vector<8x32xf32>
    %18 = tpu.matmul %16, %17, %cst_8 {dimension_numbers = #tpu.dot_dimension_numbers<[1], [0], [0], [1], [0, 0, 1, 1], [], []>} : vector<8x32xf32>, vector<32x32xf32>, vector<8x32xf32> -> vector<8x32xf32>
    %19 = arith.addf %10, %18 : vector<8x32xf32>
    %20 = vector.extract_strided_slice %0 {offsets = [0, 2], sizes = [8, 1], strides = [1, 1]} : vector<8x4xi32> to vector<8x1xi32>
    %21 = vector.broadcast %20 : vector<8x1xi32> to vector<8x256xi32>
    %22 = arith.cmpi eq, %21, %2 : vector<8x256xi32>
    %23 = arith.extui %22 : vector<8x256xi1> to vector<8x256xi32>
    %24 = arith.sitofp %23 : vector<8x256xi32> to vector<8x256xf32>
    %cst_9 = arith.constant dense<0.000000e+00> : vector<8x32xf32>
    %25 = tpu.matmul %24, %1, %cst_9 {dimension_numbers = #tpu.dot_dimension_numbers<[1], [0], [0], [1], [0, 0, 1, 1], [], []>} : vector<8x256xf32>, vector<256x32xf32>, vector<8x32xf32> -> vector<8x32xf32>
    %c64 = arith.constant 64 : index
    %c0_10 = arith.constant 0 : index
    %26 = vector.load %arg3[%c64, %c0_10] : memref<128x32xf32, #tpu.memory_space<vmem>>, vector<32x32xf32>
    %cst_11 = arith.constant dense<0.000000e+00> : vector<8x32xf32>
    %27 = tpu.matmul %25, %26, %cst_11 {dimension_numbers = #tpu.dot_dimension_numbers<[1], [0], [0], [1], [0, 0, 1, 1], [], []>} : vector<8x32xf32>, vector<32x32xf32>, vector<8x32xf32> -> vector<8x32xf32>
    %28 = arith.addf %19, %27 : vector<8x32xf32>
    %29 = vector.extract_strided_slice %0 {offsets = [0, 3], sizes = [8, 1], strides = [1, 1]} : vector<8x4xi32> to vector<8x1xi32>
    %30 = vector.broadcast %29 : vector<8x1xi32> to vector<8x256xi32>
    %31 = arith.cmpi eq, %30, %2 : vector<8x256xi32>
    %32 = arith.extui %31 : vector<8x256xi1> to vector<8x256xi32>
    %33 = arith.sitofp %32 : vector<8x256xi32> to vector<8x256xf32>
    %cst_12 = arith.constant dense<0.000000e+00> : vector<8x32xf32>
    %34 = tpu.matmul %33, %1, %cst_12 {dimension_numbers = #tpu.dot_dimension_numbers<[1], [0], [0], [1], [0, 0, 1, 1], [], []>} : vector<8x256xf32>, vector<256x32xf32>, vector<8x32xf32> -> vector<8x32xf32>
    %c96 = arith.constant 96 : index
    %c0_13 = arith.constant 0 : index
    %35 = vector.load %arg3[%c96, %c0_13] : memref<128x32xf32, #tpu.memory_space<vmem>>, vector<32x32xf32>
    %cst_14 = arith.constant dense<0.000000e+00> : vector<8x32xf32>
    %36 = tpu.matmul %34, %35, %cst_14 {dimension_numbers = #tpu.dot_dimension_numbers<[1], [0], [0], [1], [0, 0, 1, 1], [], []>} : vector<8x32xf32>, vector<32x32xf32>, vector<8x32xf32> -> vector<8x32xf32>
    %37 = arith.addf %28, %36 : vector<8x32xf32>
    %c0_15 = arith.constant 0 : index
    %c0_16 = arith.constant 0 : index
    %38 = vector.load %arg4[%c0_15, %c0_16] : memref<1x32xf32, #tpu.memory_space<vmem>>, vector<1x32xf32>
    %39 = vector.broadcast %38 : vector<1x32xf32> to vector<8x32xf32>
    %40 = arith.addf %37, %39 : vector<8x32xf32>
    %cst_17 = arith.constant 0.000000e+00 : f32
    %41 = vector.broadcast %cst_17 : f32 to vector<8x32xf32>
    %42 = arith.maximumf %40, %41 : vector<8x32xf32>
    %c0_18 = arith.constant 0 : index
    %c0_19 = arith.constant 0 : index
    %43 = vector.load %arg5[%c0_18, %c0_19] : memref<32x32xf32, #tpu.memory_space<vmem>>, vector<32x32xf32>
    %cst_20 = arith.constant dense<0.000000e+00> : vector<8x32xf32>
    %44 = tpu.matmul %42, %43, %cst_20 {dimension_numbers = #tpu.dot_dimension_numbers<[1], [0], [0], [1], [0, 0, 1, 1], [], []>} : vector<8x32xf32>, vector<32x32xf32>, vector<8x32xf32> -> vector<8x32xf32>
    %c0_21 = arith.constant 0 : index
    %c0_22 = arith.constant 0 : index
    %45 = vector.load %arg6[%c0_21, %c0_22] : memref<1x32xf32, #tpu.memory_space<vmem>>, vector<1x32xf32>
    %46 = vector.broadcast %45 : vector<1x32xf32> to vector<8x32xf32>
    %47 = arith.addf %44, %46 : vector<8x32xf32>
    %cst_23 = arith.constant 0.000000e+00 : f32
    %48 = vector.broadcast %cst_23 : f32 to vector<8x32xf32>
    %49 = arith.maximumf %47, %48 : vector<8x32xf32>
    %c0_24 = arith.constant 0 : index
    %c0_25 = arith.constant 0 : index
    %50 = vector.load %arg7[%c0_24, %c0_25] : memref<1x32xf32, #tpu.memory_space<vmem>>, vector<1x32xf32>
    %51 = vector.broadcast %50 : vector<1x32xf32> to vector<8x32xf32>
    %52 = arith.mulf %49, %51 : vector<8x32xf32>
    %cst_26 = arith.constant dense<0.000000e+00> : vector<8xf32>
    %53 = vector.multi_reduction <add>, %52, %cst_26 [1] : vector<8x32xf32> to vector<8xf32>
    %54 = vector.shape_cast %53 : vector<8xf32> to vector<8x1xf32>
    %c0_27 = arith.constant 0 : index
    %c0_28 = arith.constant 0 : index
    %55 = vector.load %arg8[%c0_27, %c0_28] : memref<1x1xf32, #tpu.memory_space<vmem>>, vector<1x1xf32>
    %56 = vector.broadcast %55 : vector<1x1xf32> to vector<8x1xf32>
    %57 = arith.addf %54, %56 : vector<8x1xf32>
    %58 = arith.negf %57 : vector<8x1xf32>
    %59 = math.exp %58 : vector<8x1xf32>
    %cst_29 = arith.constant 1.000000e+00 : f32
    %60 = vector.broadcast %cst_29 : f32 to vector<8x1xf32>
    %61 = arith.addf %60, %59 : vector<8x1xf32>
    %62 = arith.divf %60, %61 : vector<8x1xf32>
    %c0_30 = arith.constant 0 : index
    %c0_31 = arith.constant 0 : index
    %63 = vector.load %arg9[%c0_30, %c0_31] : memref<8x1xf32, #tpu.memory_space<vmem>>, vector<8x1xf32>
    tpu.vector_store %arg9[%c0_30, %c0_31], %62 {strides = array<i32>} : memref<8x1xf32, #tpu.memory_space<vmem>>, vector<8x1xf32>,
    return
  }
  func.func @transform_0(%arg0: i32) -> (i32, i32) {
    %c0_i32 = arith.constant 0 : i32
    %c0_i32_0 = arith.constant 0 : i32
    return %arg0, %c0_i32 : i32, i32
  }
  func.func @transform_1(%arg0: i32) -> (i32, i32) {
    %c0_i32 = arith.constant 0 : i32
    %c0_i32_0 = arith.constant 0 : i32
    %c0_i32_1 = arith.constant 0 : i32
    return %c0_i32, %c0_i32_0 : i32, i32
  }
  func.func @transform_2(%arg0: i32) -> (i32, i32) {
    %c0_i32 = arith.constant 0 : i32
    %c0_i32_0 = arith.constant 0 : i32
    %c0_i32_1 = arith.constant 0 : i32
    return %c0_i32, %c0_i32_0 : i32, i32
  }
  func.func @transform_3(%arg0: i32) -> (i32, i32) {
    %c0_i32 = arith.constant 0 : i32
    %c0_i32_0 = arith.constant 0 : i32
    %c0_i32_1 = arith.constant 0 : i32
    return %c0_i32, %c0_i32_0 : i32, i32
  }
  func.func @transform_4(%arg0: i32) -> (i32, i32) {
    %c0_i32 = arith.constant 0 : i32
    %c0_i32_0 = arith.constant 0 : i32
    %c0_i32_1 = arith.constant 0 : i32
    return %c0_i32, %c0_i32_0 : i32, i32
  }
  func.func @transform_5(%arg0: i32) -> (i32, i32) {
    %c0_i32 = arith.constant 0 : i32
    %c0_i32_0 = arith.constant 0 : i32
    %c0_i32_1 = arith.constant 0 : i32
    return %c0_i32, %c0_i32_0 : i32, i32
  }
  func.func @transform_6(%arg0: i32) -> (i32, i32) {
    %c0_i32 = arith.constant 0 : i32
    %c0_i32_0 = arith.constant 0 : i32
    %c0_i32_1 = arith.constant 0 : i32
    return %c0_i32, %c0_i32_0 : i32, i32
  }
  func.func @transform_7(%arg0: i32) -> (i32, i32) {
    %c0_i32 = arith.constant 0 : i32
    %c0_i32_0 = arith.constant 0 : i32
    %c0_i32_1 = arith.constant 0 : i32
    return %c0_i32, %c0_i32_0 : i32, i32
  }
  func.func @transform_8(%arg0: i32) -> (i32, i32) {
    %c0_i32 = arith.constant 0 : i32
    %c0_i32_0 = arith.constant 0 : i32
    return %arg0, %c0_i32 : i32, i32
  }
}

</mosaic_0001>

<llo_original>
// kernel: tpu_custom_call.1
$region0: #{tpu_custom_call.1}
  #allocation0 [shape = 'u32[]', space=smem, size = 0x4, offset = 0x4, fixed_abs, tag = 'smem constant byte address 0x4 - core index']
  #allocation1 [shape = 'u32[144,128]{1,0:T(1,128)}', space=vmem, size = 0x12000, scoped, tag = 'internal scratch']
  #allocation2 [shape = 'f32[1,1]{1,0:T(1,128)S(1)}', space=vmem, size = 0x200, scoped, tag = 'scoped memory for tpu_custom_call.1']
  %s0 = inlined_call_operand.vmem [shape: s32[8,4], index: 0, kind: input, shape index: {}]
  %s1 = inlined_call_operand.vmem [shape: f32[256,32], index: 1, kind: input, shape index: {}]
  %s2 = inlined_call_operand.vmem [shape: f32[128,32], index: 2, kind: input, shape index: {}]
  %s3 = inlined_call_operand.vmem [shape: f32[1,32], index: 3, kind: input, shape index: {}]
  %s4 = inlined_call_operand.vmem [shape: f32[32,32], index: 4, kind: input, shape index: {}]
  %s5 = inlined_call_operand.vmem [shape: f32[1,32], index: 5, kind: input, shape index: {}]
  %s6 = inlined_call_operand.vmem [shape: f32[1,32], index: 6, kind: input, shape index: {}]
  %s7 = inlined_call_operand.<no memory space> [shape: f32[1,1], index: 7, kind: input, shape index: {}]
  %s8 = inlined_call_operand.vmem [shape: f32[8,1], index: 8, kind: output, shape index: {}]
  %s9 = sld [smem:[#allocation0]]
  $region42: #{tpu_custom_call.1} parent=0
    _
  %s11 = ssub.s32 1, %s9
  %s12 = scalar_select 0, %s11, %s9
  %v13 = vstv %s7
  %14 = vst [vmem:[#allocation2] sm:$0x1] %v13
  // Predicated region
  $region2: #{tpu_custom_call.1} parent=0 // pred_check
    _
  $region3: #{tpu_custom_call.1} parent=0 // pred_check_branch
    %16 = sbr.rel (0) target = $region5
  $region4: #{tpu_custom_call.1} parent=0 // pred_region
    _
  $region5: #{tpu_custom_call.1} parent=0 // pred_fallthru
    _
  // Predicated region
  $region6: #{tpu_custom_call.1} parent=0 // pred_check
    _
  $region7: #{tpu_custom_call.1} parent=0 // pred_check_branch
    %18 = sbr.rel (0) target = $region9
  $region8: #{tpu_custom_call.1} parent=0 // pred_region
    _
  $region9: #{tpu_custom_call.1} parent=0 // pred_fallthru
    _
  // Predicated region
  $region10: #{tpu_custom_call.1} parent=0 // pred_check
    _
  $region11: #{tpu_custom_call.1} parent=0 // pred_check_branch
    %20 = sbr.rel (0) target = $region13
  $region12: #{tpu_custom_call.1} parent=0 // pred_region
    _
  $region13: #{tpu_custom_call.1} parent=0 // pred_fallthru
    _
  // Predicated region
  $region14: #{tpu_custom_call.1} parent=0 // pred_check
    _
  $region15: #{tpu_custom_call.1} parent=0 // pred_check_branch
    %22 = sbr.rel (0) target = $region17
  $region16: #{tpu_custom_call.1} parent=0 // pred_region
    _
  $region17: #{tpu_custom_call.1} parent=0 // pred_fallthru
    _
  // Predicated region
  $region18: #{tpu_custom_call.1} parent=0 // pred_check
    _
  $region19: #{tpu_custom_call.1} parent=0 // pred_check_branch
    %24 = sbr.rel (0) target = $region21
  $region20: #{tpu_custom_call.1} parent=0 // pred_region
    _
  $region21: #{tpu_custom_call.1} parent=0 // pred_fallthru
    _
  // Predicated region
  $region22: #{tpu_custom_call.1} parent=0 // pred_check
    _
  $region23: #{tpu_custom_call.1} parent=0 // pred_check_branch
    %26 = sbr.rel (0) target = $region25
  $region24: #{tpu_custom_call.1} parent=0 // pred_region
    _
  $region25: #{tpu_custom_call.1} parent=0 // pred_fallthru
    _
  // Predicated region
  $region26: #{tpu_custom_call.1} parent=0 // pred_check
    _
  $region27: #{tpu_custom_call.1} parent=0 // pred_check_branch
    %28 = sbr.rel (0) target = $region29
  $region28: #{tpu_custom_call.1} parent=0 // pred_region
    _
  $region29: #{tpu_custom_call.1} parent=0 // pred_fallthru
    _
  // Predicated region
  $region30: #{tpu_custom_call.1} parent=0 // pred_check
    _
  $region31: #{tpu_custom_call.1} parent=0 // pred_check_branch
    %30 = sbr.rel (0) target = $region33
  $region32: #{tpu_custom_call.1} parent=0 // pred_region
    _
  $region33: #{tpu_custom_call.1} parent=0 // pred_fallthru
    _
  %v31 = vld [vmem:[%s0] sm:$0xff]
  %v32 = vld [vmem:[%s1] sm:$0xff]
  %v33 = vld [vmem:[%s1 + $0x8] sm:$0xff]
  %v34 = vld [vmem:[%s1 + $0x10] sm:$0xff]
  %v35 = vld [vmem:[%s1 + $0x18] sm:$0xff]
  %v36 = vld [vmem:[%s1 + $0x20] sm:$0xff]
  %v37 = vld [vmem:[%s1 + $0x28] sm:$0xff]
  %v38 = vld [vmem:[%s1 + $0x30] sm:$0xff]
  %v39 = vld [vmem:[%s1 + $0x38] sm:$0xff]
  %v40 = vld [vmem:[%s1 + $0x40] sm:$0xff]
  %v41 = vld [vmem:[%s1 + $0x48] sm:$0xff]
  %v42 = vld [vmem:[%s1 + $0x50] sm:$0xff]
  %v43 = vld [vmem:[%s1 + $0x58] sm:$0xff]
  %v44 = vld [vmem:[%s1 + $0x60] sm:$0xff]
  %v45 = vld [vmem:[%s1 + $0x68] sm:$0xff]
  %v46 = vld [vmem:[%s1 + $0x70] sm:$0xff]
  %v47 = vld [vmem:[%s1 + $0x78] sm:$0xff]
  %v48 = vld [vmem:[%s1 + $0x80] sm:$0xff]
  %v49 = vld [vmem:[%s1 + $0x88] sm:$0xff]
  %v50 = vld [vmem:[%s1 + $0x90] sm:$0xff]
  %v51 = vld [vmem:[%s1 + $0x98] sm:$0xff]
  %v52 = vld [vmem:[%s1 + $0xa0] sm:$0xff]
  %v53 = vld [vmem:[%s1 + $0xa8] sm:$0xff]
  %v54 = vld [vmem:[%s1 + $0xb0] sm:$0xff]
  %v55 = vld [vmem:[%s1 + $0xb8] sm:$0xff]
  %v56 = vld [vmem:[%s1 + $0xc0] sm:$0xff]
  %v57 = vld [vmem:[%s1 + $0xc8] sm:$0xff]
  %v58 = vld [vmem:[%s1 + $0xd0] sm:$0xff]
  %v59 = vld [vmem:[%s1 + $0xd8] sm:$0xff]
  %v60 = vld [vmem:[%s1 + $0xe0] sm:$0xff]
  %v61 = vld [vmem:[%s1 + $0xe8] sm:$0xff]
  %v62 = vld [vmem:[%s1 + $0xf0] sm:$0xff]
  %v63 = vld [vmem:[%s1 + $0xf8] sm:$0xff]
  %v64 = vlaneseq
  %v65 = vand.u32 %v64, 127
  %v66 = vadd.s32 %v65, 128
  %67 = vset.pattern.permute.xlu0 0
  %68 = vperm.xlu0 %67, %v31
  %v69 = vpop.permute.xlu0 %68
  %vm70 = vcmp.eq.s32.totalorder %v69, %v65
  %vm71 = vcmp.eq.s32.totalorder %v69, %v66
  %v72 = vsel %vm70, 1, 0
  %v73 = vsel %vm71, 1, 0
  %v74 = vcvt.s32.f32 %v72
  %v75 = vcvt.s32.f32 %v73
  %76 = vmatprep.subr.mxu0 0.0
  %77 = vmatpush1.msra.mxu0 %v47
  %78 = vmatprep.subr.mxu0 0.0
  %79 = vmatpush1.msra.mxu0 %v46
  %80 = vmatprep.subr.mxu0 0.0
  %81 = vmatpush1.msra.mxu0 %v45
  %82 = vmatprep.subr.mxu0 0.0
  %83 = vmatpush1.msra.mxu0 %v44
  %84 = vmatprep.subr.mxu0 0.0
  %85 = vmatpush1.msra.mxu0 %v43
  %86 = vmatprep.subr.mxu0 0.0
  %87 = vmatpush1.msra.mxu0 %v42
  %88 = vmatprep.subr.mxu0 0.0
  %89 = vmatpush1.msra.mxu0 %v41
  %90 = vmatprep.subr.mxu0 0.0
  %91 = vmatpush1.msra.mxu0 %v40
  %92 = vmatprep.subr.mxu0 0.0
  %93 = vmatpush1.msra.mxu0 %v39
  %94 = vmatprep.subr.mxu0 0.0
  %95 = vmatpush1.msra.mxu0 %v38
  %96 = vmatprep.subr.mxu0 0.0
  %97 = vmatpush1.msra.mxu0 %v37
  %98 = vmatprep.subr.mxu0 0.0
  %99 = vmatpush1.msra.mxu0 %v36
  %100 = vmatprep.subr.mxu0 0.0
  %101 = vmatpush1.msra.mxu0 %v35
  %102 = vmatprep.subr.mxu0 0.0
  %103 = vmatpush1.msra.mxu0 %v34
  %104 = vmatprep.subr.mxu0 0.0
  %105 = vmatpush1.msra.mxu0 %v33
  %106 = vmatprep.subr.mxu0 0.0
  %107 = vmatpush1.msra.mxu0 %v32
  %108 = vmatprep.subr.mxu0 0.0
  %109 = vmatpush2.msra.mxu0 %v63
  %110 = vmatprep.subr.mxu0 0.0
  %111 = vmatpush2.msra.mxu0 %v62
  %112 = vmatprep.subr.mxu0 0.0
  %113 = vmatpush2.msra.mxu0 %v61
  %114 = vmatprep.subr.mxu0 0.0
  %115 = vmatpush2.msra.mxu0 %v60
  %116 = vmatprep.subr.mxu0 0.0
  %117 = vmatpush2.msra.mxu0 %v59
  %118 = vmatprep.subr.mxu0 0.0
  %119 = vmatpush2.msra.mxu0 %v58
  %120 = vmatprep.subr.mxu0 0.0
  %121 = vmatpush2.msra.mxu0 %v57
  %122 = vmatprep.subr.mxu0 0.0
  %123 = vmatpush2.msra.mxu0 %v56
  %124 = vmatprep.subr.mxu0 0.0
  %125 = vmatpush2.msra.mxu0 %v55
  %126 = vmatprep.subr.mxu0 0.0
  %127 = vmatpush2.msra.mxu0 %v54
  %128 = vmatprep.subr.mxu0 0.0
  %129 = vmatpush2.msra.mxu0 %v53
  %130 = vmatprep.subr.mxu0 0.0
  %131 = vmatpush2.msra.mxu0 %v52
  %132 = vmatprep.subr.mxu0 0.0
  %133 = vmatpush2.msra.mxu0 %v51
  %134 = vmatprep.subr.mxu0 0.0
  %135 = vmatpush2.msra.mxu0 %v50
  %136 = vmatprep.subr.mxu0 0.0
  %137 = vmatpush2.msra.mxu0 %v49
  %138 = vmatprep.subr.mxu0 0.0
  %139 = vmatpush2.msra.mxu0 %v48
  %140 = vmatprep.mubr.f32.mxu0 %v75
  %141 = vmatmul.mubr.f32.gmra.mxu0 %v74
  %v142 = vpop.f32.mrf.mxu0
  %v143 = vadd.f32 0.0, %v142
  %v144 = vpop.f32.mrf.mxu0
  %145 = vdwg.mxu0
  %v146 = vld [vmem:[%s2] sm:$0xff]
  %v147 = vld [vmem:[%s2 + $0x8] sm:$0xff]
  %v148 = vld [vmem:[%s2 + $0x10] sm:$0xff]
  %v149 = vld [vmem:[%s2 + $0x18] sm:$0xff]
  %150 = vset.pattern.permute.xlu0 1
  %151 = vperm.xlu0 %150, %v31
  %v152 = vpop.permute.xlu0 %151
  %vm153 = vcmp.eq.s32.totalorder %v152, %v65
  %vm154 = vcmp.eq.s32.totalorder %v152, %v66
  %v155 = vsel %vm153, 1, 0
  %v156 = vsel %vm154, 1, 0
  %v157 = vcvt.s32.f32 %v155
  %v158 = vcvt.s32.f32 %v156
  %159 = vmatprep.subr.mxu0 0.0
  %160 = vmatpush1.msra.mxu0 %v47
  %161 = vmatprep.subr.mxu0 0.0
  %162 = vmatpush1.msra.mxu0 %v46
  %163 = vmatprep.subr.mxu0 0.0
  %164 = vmatpush1.msra.mxu0 %v45
  %165 = vmatprep.subr.mxu0 0.0
  %166 = vmatpush1.msra.mxu0 %v44
  %167 = vmatprep.subr.mxu0 0.0
  %168 = vmatpush1.msra.mxu0 %v43
  %169 = vmatprep.subr.mxu0 0.0
  %170 = vmatpush1.msra.mxu0 %v42
  %171 = vmatprep.subr.mxu0 0.0
  %172 = vmatpush1.msra.mxu0 %v41
  %173 = vmatprep.subr.mxu0 0.0
  %174 = vmatpush1.msra.mxu0 %v40
  %175 = vmatprep.subr.mxu0 0.0
  %176 = vmatpush1.msra.mxu0 %v39
  %177 = vmatprep.subr.mxu0 0.0
  %178 = vmatpush1.msra.mxu0 %v38
  %179 = vmatprep.subr.mxu0 0.0
  %180 = vmatpush1.msra.mxu0 %v37
  %181 = vmatprep.subr.mxu0 0.0
  %182 = vmatpush1.msra.mxu0 %v36
  %183 = vmatprep.subr.mxu0 0.0
  %184 = vmatpush1.msra.mxu0 %v35
  %185 = vmatprep.subr.mxu0 0.0
  %186 = vmatpush1.msra.mxu0 %v34
  %187 = vmatprep.subr.mxu0 0.0
  %188 = vmatpush1.msra.mxu0 %v33
  %189 = vmatprep.subr.mxu0 0.0
  %190 = vmatpush1.msra.mxu0 %v32
  %191 = vmatprep.subr.mxu0 0.0
  %192 = vmatpush2.msra.mxu0 %v63
  %193 = vmatprep.subr.mxu0 0.0
  %194 = vmatpush2.msra.mxu0 %v62
  %195 = vmatprep.subr.mxu0 0.0
  %196 = vmatpush2.msra.mxu0 %v61
  %197 = vmatprep.subr.mxu0 0.0
  %198 = vmatpush2.msra.mxu0 %v60
  %199 = vmatprep.subr.mxu0 0.0
  %200 = vmatpush2.msra.mxu0 %v59
  %201 = vmatprep.subr.mxu0 0.0
  %202 = vmatpush2.msra.mxu0 %v58
  %203 = vmatprep.subr.mxu0 0.0
  %204 = vmatpush2.msra.mxu0 %v57
  %205 = vmatprep.subr.mxu0 0.0
  %206 = vmatpush2.msra.mxu0 %v56
  %207 = vmatprep.subr.mxu0 0.0
  %208 = vmatpush2.msra.mxu0 %v55
  %209 = vmatprep.subr.mxu0 0.0
  %210 = vmatpush2.msra.mxu0 %v54
  %211 = vmatprep.subr.mxu0 0.0
  %212 = vmatpush2.msra.mxu0 %v53
  %213 = vmatprep.subr.mxu0 0.0
  %214 = vmatpush2.msra.mxu0 %v52
  %215 = vmatprep.subr.mxu0 0.0
  %216 = vmatpush2.msra.mxu0 %v51
  %217 = vmatprep.subr.mxu0 0.0
  %218 = vmatpush2.msra.mxu0 %v50
  %219 = vmatprep.subr.mxu0 0.0
  %220 = vmatpush2.msra.mxu0 %v49
  %221 = vmatprep.subr.mxu0 0.0
  %222 = vmatpush2.msra.mxu0 %v48
  %223 = vmatprep.mubr.f32.mxu0 %v158
  %224 = vmatmul.mubr.f32.gmra.mxu0 %v157
  %v225 = vpop.f32.mrf.mxu0
  %v226 = vadd.f32 0.0, %v225
  %v227 = vpop.f32.mrf.mxu0
  %228 = vdwg.mxu0
  %v229 = vld [vmem:[%s2 + $0x20] sm:$0xff]
  %v230 = vld [vmem:[%s2 + $0x28] sm:$0xff]
  %v231 = vld [vmem:[%s2 + $0x30] sm:$0xff]
  %v232 = vld [vmem:[%s2 + $0x38] sm:$0xff]
  %vm233 = vcmask 261120
  %v235 = vsel %vm233, %v226, 0
  %237 = vmatprep.subr.mxu0 0.0
  %238 = vmatpush1.msra.mxu0 0.0
  %239 = vmatprep.subr.mxu0 0.0
  %240 = vmatpush1.msra.mxu0 0.0
  %241 = vmatprep.subr.mxu0 0.0
  %242 = vmatpush1.msra.mxu0 0.0
  %243 = vmatprep.subr.mxu0 0.0
  %244 = vmatpush1.msra.mxu0 0.0
  %245 = vmatprep.subr.mxu0 0.0
  %246 = vmatpush1.msra.mxu0 0.0
  %247 = vmatprep.subr.mxu0 0.0
  %248 = vmatpush1.msra.mxu0 0.0
  %249 = vmatprep.subr.mxu0 0.0
  %250 = vmatpush1.msra.mxu0 0.0
  %251 = vmatprep.subr.mxu0 0.0
  %252 = vmatpush1.msra.mxu0 0.0
  %253 = vmatprep.subr.mxu0 0.0
  %254 = vmatpush1.msra.mxu0 0.0
  %255 = vmatprep.subr.mxu0 0.0
  %256 = vmatpush1.msra.mxu0 0.0
  %257 = vmatprep.subr.mxu0 0.0
  %258 = vmatpush1.msra.mxu0 0.0
  %259 = vmatprep.subr.mxu0 0.0
  %260 = vmatpush1.msra.mxu0 0.0
  %261 = vmatprep.subr.mxu0 0.0
  %262 = vmatpush1.msra.mxu0 %v232
  %263 = vmatprep.subr.mxu0 0.0
  %264 = vmatpush1.msra.mxu0 %v231
  %265 = vmatprep.subr.mxu0 0.0
  %266 = vmatpush1.msra.mxu0 %v230
  %267 = vmatprep.subr.mxu0 0.0
  %268 = vmatpush1.msra.mxu0 %v229
  %269 = vmatprep.subr.mxu0 0.0
  %270 = vmatpush2.msra.mxu0 0.0
  %271 = vmatprep.subr.mxu0 0.0
  %272 = vmatpush2.msra.mxu0 0.0
  %273 = vmatprep.subr.mxu0 0.0
  %274 = vmatpush2.msra.mxu0 0.0
  %275 = vmatprep.subr.mxu0 0.0
  %276 = vmatpush2.msra.mxu0 0.0
  %277 = vmatprep.subr.mxu0 0.0
  %278 = vmatpush2.msra.mxu0 0.0
  %279 = vmatprep.subr.mxu0 0.0
  %280 = vmatpush2.msra.mxu0 0.0
  %281 = vmatprep.subr.mxu0 0.0
  %282 = vmatpush2.msra.mxu0 0.0
  %283 = vmatprep.subr.mxu0 0.0
  %284 = vmatpush2.msra.mxu0 0.0
  %285 = vmatprep.subr.mxu0 0.0
  %286 = vmatpush2.msra.mxu0 0.0
  %287 = vmatprep.subr.mxu0 0.0
  %288 = vmatpush2.msra.mxu0 0.0
  %289 = vmatprep.subr.mxu0 0.0
  %290 = vmatpush2.msra.mxu0 0.0
  %291 = vmatprep.subr.mxu0 0.0
  %292 = vmatpush2.msra.mxu0 0.0
  %293 = vmatprep.subr.mxu0 0.0
  %294 = vmatpush2.msra.mxu0 0.0
  %295 = vmatprep.subr.mxu0 0.0
  %296 = vmatpush2.msra.mxu0 0.0
  %297 = vmatprep.subr.mxu0 0.0
  %298 = vmatpush2.msra.mxu0 0.0
  %299 = vmatprep.subr.mxu0 0.0
  %300 = vmatpush2.msra.mxu0 0.0
  %301 = vmatprep.mubr.f32.mxu0 0.0
  %302 = vmatmul.mubr.f32.gmra.mxu0 %v235
  %v303 = vpop.f32.mrf.mxu0
  %v304 = vadd.f32 0.0, %v303
  %v305 = vpop.f32.mrf.mxu0
  %306 = vdwg.mxu0
  %v308 = vsel %vm233, %v143, 0
  %310 = vmatprep.subr.mxu0 0.0
  %311 = vmatpush1.msra.mxu0 0.0
  %312 = vmatprep.subr.mxu0 0.0
  %313 = vmatpush1.msra.mxu0 0.0
  %314 = vmatprep.subr.mxu0 0.0
  %315 = vmatpush1.msra.mxu0 0.0
  %316 = vmatprep.subr.mxu0 0.0
  %317 = vmatpush1.msra.mxu0 0.0
  %318 = vmatprep.subr.mxu0 0.0
  %319 = vmatpush1.msra.mxu0 0.0
  %320 = vmatprep.subr.mxu0 0.0
  %321 = vmatpush1.msra.mxu0 0.0
  %322 = vmatprep.subr.mxu0 0.0
  %323 = vmatpush1.msra.mxu0 0.0
  %324 = vmatprep.subr.mxu0 0.0
  %325 = vmatpush1.msra.mxu0 0.0
  %326 = vmatprep.subr.mxu0 0.0
  %327 = vmatpush1.msra.mxu0 0.0
  %328 = vmatprep.subr.mxu0 0.0
  %329 = vmatpush1.msra.mxu0 0.0
  %330 = vmatprep.subr.mxu0 0.0
  %331 = vmatpush1.msra.mxu0 0.0
  %332 = vmatprep.subr.mxu0 0.0
  %333 = vmatpush1.msra.mxu0 0.0
  %334 = vmatprep.subr.mxu0 0.0
  %335 = vmatpush1.msra.mxu0 %v149
  %336 = vmatprep.subr.mxu0 0.0
  %337 = vmatpush1.msra.mxu0 %v148
  %338 = vmatprep.subr.mxu0 0.0
  %339 = vmatpush1.msra.mxu0 %v147
  %340 = vmatprep.subr.mxu0 0.0
  %341 = vmatpush1.msra.mxu0 %v146
  %342 = vmatprep.subr.mxu0 0.0
  %343 = vmatpush2.msra.mxu0 0.0
  %344 = vmatprep.subr.mxu0 0.0
  %345 = vmatpush2.msra.mxu0 0.0
  %346 = vmatprep.subr.mxu0 0.0
  %347 = vmatpush2.msra.mxu0 0.0
  %348 = vmatprep.subr.mxu0 0.0
  %349 = vmatpush2.msra.mxu0 0.0
  %350 = vmatprep.subr.mxu0 0.0
  %351 = vmatpush2.msra.mxu0 0.0
  %352 = vmatprep.subr.mxu0 0.0
  %353 = vmatpush2.msra.mxu0 0.0
  %354 = vmatprep.subr.mxu0 0.0
  %355 = vmatpush2.msra.mxu0 0.0
  %356 = vmatprep.subr.mxu0 0.0
  %357 = vmatpush2.msra.mxu0 0.0
  %358 = vmatprep.subr.mxu0 0.0
  %359 = vmatpush2.msra.mxu0 0.0
  %360 = vmatprep.subr.mxu0 0.0
  %361 = vmatpush2.msra.mxu0 0.0
  %362 = vmatprep.subr.mxu0 0.0
  %363 = vmatpush2.msra.mxu0 0.0
  %364 = vmatprep.subr.mxu0 0.0
  %365 = vmatpush2.msra.mxu0 0.0
  %366 = vmatprep.subr.mxu0 0.0
  %367 = vmatpush2.msra.mxu0 0.0
  %368 = vmatprep.subr.mxu0 0.0
  %369 = vmatpush2.msra.mxu0 0.0
  %370 = vmatprep.subr.mxu0 0.0
  %371 = vmatpush2.msra.mxu0 0.0
  %372 = vmatprep.subr.mxu0 0.0
  %373 = vmatpush2.msra.mxu0 0.0
  %374 = vmatprep.mubr.f32.mxu0 0.0
  %375 = vmatmul.mubr.f32.gmra.mxu0 %v308
  %v376 = vpop.f32.mrf.mxu0
  %v377 = vadd.f32 %v304, %v376
  %v378 = vpop.f32.mrf.mxu0
  %379 = vdwg.mxu0
  %380 = vset.pattern.permute.xlu0 2
  %381 = vperm.xlu0 %380, %v31
  %v382 = vpop.permute.xlu0 %381
  %vm383 = vcmp.eq.s32.totalorder %v382, %v65
  %vm384 = vcmp.eq.s32.totalorder %v382, %v66
  %v385 = vsel %vm383, 1, 0
  %v386 = vsel %vm384, 1, 0
  %v387 = vcvt.s32.f32 %v385
  %v388 = vcvt.s32.f32 %v386
  %389 = vmatprep.subr.mxu0 0.0
  %390 = vmatpush1.msra.mxu0 %v47
  %391 = vmatprep.subr.mxu0 0.0
  %392 = vmatpush1.msra.mxu0 %v46
  %393 = vmatprep.subr.mxu0 0.0
  %394 = vmatpush1.msra.mxu0 %v45
  %395 = vmatprep.subr.mxu0 0.0
  %396 = vmatpush1.msra.mxu0 %v44
  %397 = vmatprep.subr.mxu0 0.0
  %398 = vmatpush1.msra.mxu0 %v43
  %399 = vmatprep.subr.mxu0 0.0
  %400 = vmatpush1.msra.mxu0 %v42
  %401 = vmatprep.subr.mxu0 0.0
  %402 = vmatpush1.msra.mxu0 %v41
  %403 = vmatprep.subr.mxu0 0.0
  %404 = vmatpush1.msra.mxu0 %v40
  %405 = vmatprep.subr.mxu0 0.0
  %406 = vmatpush1.msra.mxu0 %v39
  %407 = vmatprep.subr.mxu0 0.0
  %408 = vmatpush1.msra.mxu0 %v38
  %409 = vmatprep.subr.mxu0 0.0
  %410 = vmatpush1.msra.mxu0 %v37
  %411 = vmatprep.subr.mxu0 0.0
  %412 = vmatpush1.msra.mxu0 %v36
  %413 = vmatprep.subr.mxu0 0.0
  %414 = vmatpush1.msra.mxu0 %v35
  %415 = vmatprep.subr.mxu0 0.0
  %416 = vmatpush1.msra.mxu0 %v34
  %417 = vmatprep.subr.mxu0 0.0
  %418 = vmatpush1.msra.mxu0 %v33
  %419 = vmatprep.subr.mxu0 0.0
  %420 = vmatpush1.msra.mxu0 %v32
  %421 = vmatprep.subr.mxu0 0.0
  %422 = vmatpush2.msra.mxu0 %v63
  %423 = vmatprep.subr.mxu0 0.0
  %424 = vmatpush2.msra.mxu0 %v62
  %425 = vmatprep.subr.mxu0 0.0
  %426 = vmatpush2.msra.mxu0 %v61
  %427 = vmatprep.subr.mxu0 0.0
  %428 = vmatpush2.msra.mxu0 %v60
  %429 = vmatprep.subr.mxu0 0.0
  %430 = vmatpush2.msra.mxu0 %v59
  %431 = vmatprep.subr.mxu0 0.0
  %432 = vmatpush2.msra.mxu0 %v58
  %433 = vmatprep.subr.mxu0 0.0
  %434 = vmatpush2.msra.mxu0 %v57
  %435 = vmatprep.subr.mxu0 0.0
  %436 = vmatpush2.msra.mxu0 %v56
  %437 = vmatprep.subr.mxu0 0.0
  %438 = vmatpush2.msra.mxu0 %v55
  %439 = vmatprep.subr.mxu0 0.0
  %440 = vmatpush2.msra.mxu0 %v54
  %441 = vmatprep.subr.mxu0 0.0
  %442 = vmatpush2.msra.mxu0 %v53
  %443 = vmatprep.subr.mxu0 0.0
  %444 = vmatpush2.msra.mxu0 %v52
  %445 = vmatprep.subr.mxu0 0.0
  %446 = vmatpush2.msra.mxu0 %v51
  %447 = vmatprep.subr.mxu0 0.0
  %448 = vmatpush2.msra.mxu0 %v50
  %449 = vmatprep.subr.mxu0 0.0
  %450 = vmatpush2.msra.mxu0 %v49
  %451 = vmatprep.subr.mxu0 0.0
  %452 = vmatpush2.msra.mxu0 %v48
  %453 = vmatprep.mubr.f32.mxu0 %v388
  %454 = vmatmul.mubr.f32.gmra.mxu0 %v387
  %v455 = vpop.f32.mrf.mxu0
  %v456 = vadd.f32 0.0, %v455
  %v457 = vpop.f32.mrf.mxu0
  %458 = vdwg.mxu0
  %v459 = vld [vmem:[%s2 + $0x40] sm:$0xff]
  %v460 = vld [vmem:[%s2 + $0x48] sm:$0xff]
  %v461 = vld [vmem:[%s2 + $0x50] sm:$0xff]
  %v462 = vld [vmem:[%s2 + $0x58] sm:$0xff]
  %v464 = vsel %vm233, %v456, 0
  %466 = vmatprep.subr.mxu0 0.0
  %467 = vmatpush1.msra.mxu0 0.0
  %468 = vmatprep.subr.mxu0 0.0
  %469 = vmatpush1.msra.mxu0 0.0
  %470 = vmatprep.subr.mxu0 0.0
  %471 = vmatpush1.msra.mxu0 0.0
  %472 = vmatprep.subr.mxu0 0.0
  %473 = vmatpush1.msra.mxu0 0.0
  %474 = vmatprep.subr.mxu0 0.0
  %475 = vmatpush1.msra.mxu0 0.0
  %476 = vmatprep.subr.mxu0 0.0
  %477 = vmatpush1.msra.mxu0 0.0
  %478 = vmatprep.subr.mxu0 0.0
  %479 = vmatpush1.msra.mxu0 0.0
  %480 = vmatprep.subr.mxu0 0.0
  %481 = vmatpush1.msra.mxu0 0.0
  %482 = vmatprep.subr.mxu0 0.0
  %483 = vmatpush1.msra.mxu0 0.0
  %484 = vmatprep.subr.mxu0 0.0
  %485 = vmatpush1.msra.mxu0 0.0
  %486 = vmatprep.subr.mxu0 0.0
  %487 = vmatpush1.msra.mxu0 0.0
  %488 = vmatprep.subr.mxu0 0.0
  %489 = vmatpush1.msra.mxu0 0.0
  %490 = vmatprep.subr.mxu0 0.0
  %491 = vmatpush1.msra.mxu0 %v462
  %492 = vmatprep.subr.mxu0 0.0
  %493 = vmatpush1.msra.mxu0 %v461
  %494 = vmatprep.subr.mxu0 0.0
  %495 = vmatpush1.msra.mxu0 %v460
  %496 = vmatprep.subr.mxu0 0.0
  %497 = vmatpush1.msra.mxu0 %v459
  %498 = vmatprep.subr.mxu0 0.0
  %499 = vmatpush2.msra.mxu0 0.0
  %500 = vmatprep.subr.mxu0 0.0
  %501 = vmatpush2.msra.mxu0 0.0
  %502 = vmatprep.subr.mxu0 0.0
  %503 = vmatpush2.msra.mxu0 0.0
  %504 = vmatprep.subr.mxu0 0.0
  %505 = vmatpush2.msra.mxu0 0.0
  %506 = vmatprep.subr.mxu0 0.0
  %507 = vmatpush2.msra.mxu0 0.0
  %508 = vmatprep.subr.mxu0 0.0
  %509 = vmatpush2.msra.mxu0 0.0
  %510 = vmatprep.subr.mxu0 0.0
  %511 = vmatpush2.msra.mxu0 0.0
  %512 = vmatprep.subr.mxu0 0.0
  %513 = vmatpush2.msra.mxu0 0.0
  %514 = vmatprep.subr.mxu0 0.0
  %515 = vmatpush2.msra.mxu0 0.0
  %516 = vmatprep.subr.mxu0 0.0
  %517 = vmatpush2.msra.mxu0 0.0
  %518 = vmatprep.subr.mxu0 0.0
  %519 = vmatpush2.msra.mxu0 0.0
  %520 = vmatprep.subr.mxu0 0.0
  %521 = vmatpush2.msra.mxu0 0.0
  %522 = vmatprep.subr.mxu0 0.0
  %523 = vmatpush2.msra.mxu0 0.0
  %524 = vmatprep.subr.mxu0 0.0
  %525 = vmatpush2.msra.mxu0 0.0
  %526 = vmatprep.subr.mxu0 0.0
  %527 = vmatpush2.msra.mxu0 0.0
  %528 = vmatprep.subr.mxu0 0.0
  %529 = vmatpush2.msra.mxu0 0.0
  %530 = vmatprep.mubr.f32.mxu0 0.0
  %531 = vmatmul.mubr.f32.gmra.mxu0 %v464
  %v532 = vpop.f32.mrf.mxu0
  %v533 = vadd.f32 0.0, %v532
  %v534 = vpop.f32.mrf.mxu0
  %535 = vdwg.mxu0
  %v536 = vadd.f32 %v377, %v533
  %537 = vset.pattern.permute.xlu0 3
  %538 = vperm.xlu0 %537, %v31
  %v539 = vpop.permute.xlu0 %538
  %vm540 = vcmp.eq.s32.totalorder %v539, %v65
  %vm541 = vcmp.eq.s32.totalorder %v539, %v66
  %v542 = vsel %vm540, 1, 0
  %v543 = vsel %vm541, 1, 0
  %v544 = vcvt.s32.f32 %v542
  %v545 = vcvt.s32.f32 %v543
  %546 = vmatprep.subr.mxu0 0.0
  %547 = vmatpush1.msra.mxu0 %v47
  %548 = vmatprep.subr.mxu0 0.0
  %549 = vmatpush1.msra.mxu0 %v46
  %550 = vmatprep.subr.mxu0 0.0
  %551 = vmatpush1.msra.mxu0 %v45
  %552 = vmatprep.subr.mxu0 0.0
  %553 = vmatpush1.msra.mxu0 %v44
  %554 = vmatprep.subr.mxu0 0.0
  %555 = vmatpush1.msra.mxu0 %v43
  %556 = vmatprep.subr.mxu0 0.0
  %557 = vmatpush1.msra.mxu0 %v42
  %558 = vmatprep.subr.mxu0 0.0
  %559 = vmatpush1.msra.mxu0 %v41
  %560 = vmatprep.subr.mxu0 0.0
  %561 = vmatpush1.msra.mxu0 %v40
  %562 = vmatprep.subr.mxu0 0.0
  %563 = vmatpush1.msra.mxu0 %v39
  %564 = vmatprep.subr.mxu0 0.0
  %565 = vmatpush1.msra.mxu0 %v38
  %566 = vmatprep.subr.mxu0 0.0
  %567 = vmatpush1.msra.mxu0 %v37
  %568 = vmatprep.subr.mxu0 0.0
  %569 = vmatpush1.msra.mxu0 %v36
  %570 = vmatprep.subr.mxu0 0.0
  %571 = vmatpush1.msra.mxu0 %v35
  %572 = vmatprep.subr.mxu0 0.0
  %573 = vmatpush1.msra.mxu0 %v34
  %574 = vmatprep.subr.mxu0 0.0
  %575 = vmatpush1.msra.mxu0 %v33
  %576 = vmatprep.subr.mxu0 0.0
  %577 = vmatpush1.msra.mxu0 %v32
  %578 = vmatprep.subr.mxu0 0.0
  %579 = vmatpush2.msra.mxu0 %v63
  %580 = vmatprep.subr.mxu0 0.0
  %581 = vmatpush2.msra.mxu0 %v62
  %582 = vmatprep.subr.mxu0 0.0
  %583 = vmatpush2.msra.mxu0 %v61
  %584 = vmatprep.subr.mxu0 0.0
  %585 = vmatpush2.msra.mxu0 %v60
  %586 = vmatprep.subr.mxu0 0.0
  %587 = vmatpush2.msra.mxu0 %v59
  %588 = vmatprep.subr.mxu0 0.0
  %589 = vmatpush2.msra.mxu0 %v58
  %590 = vmatprep.subr.mxu0 0.0
  %591 = vmatpush2.msra.mxu0 %v57
  %592 = vmatprep.subr.mxu0 0.0
  %593 = vmatpush2.msra.mxu0 %v56
  %594 = vmatprep.subr.mxu0 0.0
  %595 = vmatpush2.msra.mxu0 %v55
  %596 = vmatprep.subr.mxu0 0.0
  %597 = vmatpush2.msra.mxu0 %v54
  %598 = vmatprep.subr.mxu0 0.0
  %599 = vmatpush2.msra.mxu0 %v53
  %600 = vmatprep.subr.mxu0 0.0
  %601 = vmatpush2.msra.mxu0 %v52
  %602 = vmatprep.subr.mxu0 0.0
  %603 = vmatpush2.msra.mxu0 %v51
  %604 = vmatprep.subr.mxu0 0.0
  %605 = vmatpush2.msra.mxu0 %v50
  %606 = vmatprep.subr.mxu0 0.0
  %607 = vmatpush2.msra.mxu0 %v49
  %608 = vmatprep.subr.mxu0 0.0
  %609 = vmatpush2.msra.mxu0 %v48
  %610 = vmatprep.mubr.f32.mxu0 %v545
  %611 = vmatmul.mubr.f32.gmra.mxu0 %v544
  %v612 = vpop.f32.mrf.mxu0
  %v613 = vadd.f32 0.0, %v612
  %v614 = vpop.f32.mrf.mxu0
  %615 = vdwg.mxu0
  %v616 = vld [vmem:[%s2 + $0x60] sm:$0xff]
  %v617 = vld [vmem:[%s2 + $0x68] sm:$0xff]
  %v618 = vld [vmem:[%s2 + $0x70] sm:$0xff]
  %v619 = vld [vmem:[%s2 + $0x78] sm:$0xff]
  %v621 = vsel %vm233, %v613, 0
  %623 = vmatprep.subr.mxu0 0.0
  %624 = vmatpush1.msra.mxu0 0.0
  %625 = vmatprep.subr.mxu0 0.0
  %626 = vmatpush1.msra.mxu0 0.0
  %627 = vmatprep.subr.mxu0 0.0
  %628 = vmatpush1.msra.mxu0 0.0
  %629 = vmatprep.subr.mxu0 0.0
  %630 = vmatpush1.msra.mxu0 0.0
  %631 = vmatprep.subr.mxu0 0.0
  %632 = vmatpush1.msra.mxu0 0.0
  %633 = vmatprep.subr.mxu0 0.0
  %634 = vmatpush1.msra.mxu0 0.0
  %635 = vmatprep.subr.mxu0 0.0
  %636 = vmatpush1.msra.mxu0 0.0
  %637 = vmatprep.subr.mxu0 0.0
  %638 = vmatpush1.msra.mxu0 0.0
  %639 = vmatprep.subr.mxu0 0.0
  %640 = vmatpush1.msra.mxu0 0.0
  %641 = vmatprep.subr.mxu0 0.0
  %642 = vmatpush1.msra.mxu0 0.0
  %643 = vmatprep.subr.mxu0 0.0
  %644 = vmatpush1.msra.mxu0 0.0
  %645 = vmatprep.subr.mxu0 0.0
  %646 = vmatpush1.msra.mxu0 0.0
  %647 = vmatprep.subr.mxu0 0.0
  %648 = vmatpush1.msra.mxu0 %v619
  %649 = vmatprep.subr.mxu0 0.0
  %650 = vmatpush1.msra.mxu0 %v618
  %651 = vmatprep.subr.mxu0 0.0
  %652 = vmatpush1.msra.mxu0 %v617
  %653 = vmatprep.subr.mxu0 0.0
  %654 = vmatpush1.msra.mxu0 %v616
  %655 = vmatprep.subr.mxu0 0.0
  %656 = vmatpush2.msra.mxu0 0.0
  %657 = vmatprep.subr.mxu0 0.0
  %658 = vmatpush2.msra.mxu0 0.0
  %659 = vmatprep.subr.mxu0 0.0
  %660 = vmatpush2.msra.mxu0 0.0
  %661 = vmatprep.subr.mxu0 0.0
  %662 = vmatpush2.msra.mxu0 0.0
  %663 = vmatprep.subr.mxu0 0.0
  %664 = vmatpush2.msra.mxu0 0.0
  %665 = vmatprep.subr.mxu0 0.0
  %666 = vmatpush2.msra.mxu0 0.0
  %667 = vmatprep.subr.mxu0 0.0
  %668 = vmatpush2.msra.mxu0 0.0
  %669 = vmatprep.subr.mxu0 0.0
  %670 = vmatpush2.msra.mxu0 0.0
  %671 = vmatprep.subr.mxu0 0.0
  %672 = vmatpush2.msra.mxu0 0.0
  %673 = vmatprep.subr.mxu0 0.0
  %674 = vmatpush2.msra.mxu0 0.0
  %675 = vmatprep.subr.mxu0 0.0
  %676 = vmatpush2.msra.mxu0 0.0
  %677 = vmatprep.subr.mxu0 0.0
  %678 = vmatpush2.msra.mxu0 0.0
  %679 = vmatprep.subr.mxu0 0.0
  %680 = vmatpush2.msra.mxu0 0.0
  %681 = vmatprep.subr.mxu0 0.0
  %682 = vmatpush2.msra.mxu0 0.0
  %683 = vmatprep.subr.mxu0 0.0
  %684 = vmatpush2.msra.mxu0 0.0
  %685 = vmatprep.subr.mxu0 0.0
  %686 = vmatpush2.msra.mxu0 0.0
  %687 = vmatprep.mubr.f32.mxu0 0.0
  %688 = vmatmul.mubr.f32.gmra.mxu0 %v621
  %v689 = vpop.f32.mrf.mxu0
  %v690 = vadd.f32 0.0, %v689
  %v691 = vpop.f32.mrf.mxu0
  %692 = vdwg.mxu0
  %v693 = vadd.f32 %v536, %v690
  %v694 = vld [vmem:[%s3] sm:$0x1]
  %v696 = vlaneseq
  %v697 = vshrl.u32 %v696, 7
  %v698 = vsub.s32 0, %v697
  %v699 = vrot.slane %v694, %v698
  %v701 = vadd.f32 %v693, %v699
  %v702 = vmax.f32 %v701, 0.0
  %v703 = vld [vmem:[%s4] sm:$0xff]
  %v704 = vld [vmem:[%s4 + $0x8] sm:$0xff]
  %v705 = vld [vmem:[%s4 + $0x10] sm:$0xff]
  %v706 = vld [vmem:[%s4 + $0x18] sm:$0xff]
  %v707 = vld [vmem:[%s5] sm:$0x1]
  %v709 = vlaneseq
  %v710 = vshrl.u32 %v709, 7
  %v711 = vsub.s32 0, %v710
  %v712 = vrot.slane %v707, %v711
  %v715 = vsel %vm233, %v702, 0
  %717 = vmatprep.subr.mxu0 0.0
  %718 = vmatpush1.msra.mxu0 0.0
  %719 = vmatprep.subr.mxu0 0.0
  %720 = vmatpush1.msra.mxu0 0.0
  %721 = vmatprep.subr.mxu0 0.0
  %722 = vmatpush1.msra.mxu0 0.0
  %723 = vmatprep.subr.mxu0 0.0
  %724 = vmatpush1.msra.mxu0 0.0
  %725 = vmatprep.subr.mxu0 0.0
  %726 = vmatpush1.msra.mxu0 0.0
  %727 = vmatprep.subr.mxu0 0.0
  %728 = vmatpush1.msra.mxu0 0.0
  %729 = vmatprep.subr.mxu0 0.0
  %730 = vmatpush1.msra.mxu0 0.0
  %731 = vmatprep.subr.mxu0 0.0
  %732 = vmatpush1.msra.mxu0 0.0
  %733 = vmatprep.subr.mxu0 0.0
  %734 = vmatpush1.msra.mxu0 0.0
  %735 = vmatprep.subr.mxu0 0.0
  %736 = vmatpush1.msra.mxu0 0.0
  %737 = vmatprep.subr.mxu0 0.0
  %738 = vmatpush1.msra.mxu0 0.0
  %739 = vmatprep.subr.mxu0 0.0
  %740 = vmatpush1.msra.mxu0 0.0
  %741 = vmatprep.subr.mxu0 0.0
  %742 = vmatpush1.msra.mxu0 %v706
  %743 = vmatprep.subr.mxu0 0.0
  %744 = vmatpush1.msra.mxu0 %v705
  %745 = vmatprep.subr.mxu0 0.0
  %746 = vmatpush1.msra.mxu0 %v704
  %747 = vmatprep.subr.mxu0 0.0
  %748 = vmatpush1.msra.mxu0 %v703
  %749 = vmatprep.subr.mxu0 0.0
  %750 = vmatpush2.msra.mxu0 0.0
  %751 = vmatprep.subr.mxu0 0.0
  %752 = vmatpush2.msra.mxu0 0.0
  %753 = vmatprep.subr.mxu0 0.0
  %754 = vmatpush2.msra.mxu0 0.0
  %755 = vmatprep.subr.mxu0 0.0
  %756 = vmatpush2.msra.mxu0 0.0
  %757 = vmatprep.subr.mxu0 0.0
  %758 = vmatpush2.msra.mxu0 0.0
  %759 = vmatprep.subr.mxu0 0.0
  %760 = vmatpush2.msra.mxu0 0.0
  %761 = vmatprep.subr.mxu0 0.0
  %762 = vmatpush2.msra.mxu0 0.0
  %763 = vmatprep.subr.mxu0 0.0
  %764 = vmatpush2.msra.mxu0 0.0
  %765 = vmatprep.subr.mxu0 0.0
  %766 = vmatpush2.msra.mxu0 0.0
  %767 = vmatprep.subr.mxu0 0.0
  %768 = vmatpush2.msra.mxu0 0.0
  %769 = vmatprep.subr.mxu0 0.0
  %770 = vmatpush2.msra.mxu0 0.0
  %771 = vmatprep.subr.mxu0 0.0
  %772 = vmatpush2.msra.mxu0 0.0
  %773 = vmatprep.subr.mxu0 0.0
  %774 = vmatpush2.msra.mxu0 0.0
  %775 = vmatprep.subr.mxu0 0.0
  %776 = vmatpush2.msra.mxu0 0.0
  %777 = vmatprep.subr.mxu0 0.0
  %778 = vmatpush2.msra.mxu0 0.0
  %779 = vmatprep.subr.mxu0 0.0
  %780 = vmatpush2.msra.mxu0 0.0
  %781 = vmatprep.mubr.f32.mxu0 0.0
  %782 = vmatmul.mubr.f32.gmra.mxu0 %v715
  %v783 = vpop.f32.mrf.mxu0
  %v784 = vadd.f32 %v712, %v783
  %v785 = vpop.f32.mrf.mxu0
  %786 = vdwg.mxu0
  %v787 = vmax.f32 %v784, 0.0
  %v788 = vld [vmem:[%s6] sm:$0x1]
  %v790 = vlaneseq
  %v791 = vshrl.u32 %v790, 7
  %v792 = vsub.s32 0, %v791
  %v793 = vrot.slane %v788, %v792
  %v795 = vmul.f32 %v787, %v793
  %v796 = vsel %vm233, %v795, 0.0
  %797 = vadd.xlane.f32.xlu0 %v796
  %v798 = vpop.xlane.xlu0 %797
  %v799 = vld [vmem:[#allocation2] sm:$0x1]
  %v801 = vlaneseq
  %v802 = vshrl.u32 %v801, 7
  %v803 = vsub.s32 0, %v802
  %v804 = vrot.slane %v799, %v803
  %v806 = vadd.f32 %v798, %v804
  %v807 = vxor.u32 %v806, 2147483648
  %v808 = vmul.f32 %v807, 1.442695
  %v809 = vpow.pop %v808
  %v810 = vadd.f32 %v809, 1.0
  %v811 = vrcp.pop %v810
  %v812 = vmul.f32 1.0, %v811
  %vm813 = vcmask 7168
  %814 = vst.msk [vmem:[%s8] sm:$0xff] %vm813, %v812
  // Predicated region
  $region34: #{tpu_custom_call.1} parent=0 // pred_check
    _
  $region35: #{tpu_custom_call.1} parent=0 // pred_check_branch
    %816 = sbr.rel (0) target = $region37
  $region36: #{tpu_custom_call.1} parent=0 // pred_region
    _
  $region37: #{tpu_custom_call.1} parent=0 // pred_fallthru
    _
  // Predicated region
  $region38: #{tpu_custom_call.1} parent=0 // pred_check
    _
  $region39: #{tpu_custom_call.1} parent=0 // pred_check_branch
    %818 = sbr.rel (0) target = $region41
  $region40: #{tpu_custom_call.1} parent=0 // pred_region
    _
  $region41: #{tpu_custom_call.1} parent=0 // pred_fallthru
    _

</llo_original>
